<compile_context>
chip_gen: v6e
topology: v6e:2x2x1
jax: 0.10.0
libtpu: 0.0.40
codegen_flags: <defaults>
</compile_context>

<pallas_src>
import functools
import math

import jax
import jax.numpy as jnp
from jax import lax
from jax.experimental import pallas as pl
from jax.experimental.pallas import tpu as pltpu

EPS = 1e-12            # matches torch F.normalize eps
EPS2 = EPS * EPS


def _round_up(x, m):
    return (x + m - 1) // m * m


def _make_kernel(bn, S, D, K, mdt, normalize_out):
    """Kernel for one (bn, S, D) batch block and one (K*D, OUT_t) PCA-weight tile."""

    def kernel(x_ref, w_ref, c_ref, wp_ref, b_ref, o_ref, vlad_scr, flat_scr):
        # x_ref:    (bn, S, D)      activations, D lane-dense
        # w_ref:    (D, K)          soft-assignment 1x1 conv weight (pre-transposed)
        # c_ref:    (K, D)          centroids
        # wp_ref:   (K*D, OUT_t)    PCA weight tile, row index = k*D + d (torch flatten order)
        # b_ref:    (1, OUT_t)      PCA bias tile
        # o_ref:    (1, bn, OUT_t)  output tile
        # vlad_scr: (bn, K, D)      per-image VLAD matrices (persist across OUT tiles)
        # flat_scr: (bn, K*D)       flattened normalized VLAD rows (persist across OUT tiles)
        j = pl.program_id(1)

        @pl.when(j == 0)
        def _build_vlad():
            w_dk = w_ref[...].astype(mdt)                       # (D, K)
            cent = c_ref[...]                                   # (K, D)
            ones_s = jnp.ones((S, 1), jnp.float32)

            def body(b, carry):
                x = x_ref[b]                                    # (S, D)
                # input L2 normalization over descriptor dim D (lane reduction)
                ss = jnp.sum(x * x, axis=-1, keepdims=True)     # (S, 1)
                xn = x * lax.rsqrt(jnp.maximum(ss, EPS2))       # (S, D)
                xn_m = xn.astype(mdt)

                # soft assignment + softmax over clusters (no padded columns -> no mask)
                logits = jnp.dot(xn_m, w_dk,
                                 preferred_element_type=jnp.float32)          # (S, K)
                logits = logits - jnp.max(logits, axis=-1, keepdims=True)
                e = jnp.exp(logits)
                denom = jnp.sum(e, axis=-1, keepdims=True)                    # (S, 1)
                a = e * pl.reciprocal(denom, approx=True)                     # (S, K) EUP rcp

                # vlad[k, d] = sum_s a[s, k] * xn[s, d] - c[k, d] * sum_s a[s, k]
                agg = lax.dot_general(a.astype(mdt), xn_m,
                                      (((0,), (0,)), ((), ())),
                                      preferred_element_type=jnp.float32)     # (K, D)
                a_sum = lax.dot_general(a, ones_s,
                                        (((0,), (0,)), ((), ())),
                                        preferred_element_type=jnp.float32)   # (K, 1)
                vlad = agg - cent * a_sum                                     # (K, D)

                # intra-normalization over D (per cluster)
                rs = jnp.sum(vlad * vlad, axis=-1, keepdims=True)             # (K, 1)
                inv = lax.rsqrt(jnp.maximum(rs, EPS2))
                vlad = vlad * inv
                # post-intra-norm row sum-of-squares derived algebraically (= rs/max(rs,eps^2))
                g = jnp.sum(rs * inv * inv, axis=0, keepdims=True)            # (1, 1)
                vlad = vlad * lax.rsqrt(jnp.maximum(g, EPS2))

                vlad_scr[b] = vlad                              # plain aligned (K, D) store
                return carry

            lax.fori_loop(0, bn, body, 0)
            # one batched relayout per grid step (not per image); order = k*D + d
            flat_scr[...] = vlad_scr[...].reshape(bn, K * D)

        # PCA (1x1 conv == linear) for the whole batch block on this OUT tile
        flat = flat_scr[...].astype(mdt)                                      # (bn, K*D)
        y = jnp.dot(flat, wp_ref[...], preferred_element_type=jnp.float32) + b_ref[...]
        if normalize_out:
            yn = jnp.sum(y * y, axis=-1, keepdims=True)
            y = y * lax.rsqrt(jnp.maximum(yn, EPS2))
        o_ref[0] = y

    return kernel


def netvlad_pca(x_nchw, w_assign, centroids, w_pca, b_pca, *,
                bn=None, out_tile=2048, matmul_dtype=jnp.float32):
    """NetVLAD + PCA forward.

    x_nchw: (N, D, H, W); w_assign/centroids: (K, D); w_pca: (OUT, K*D); b_pca: (OUT,).
    matmul_dtype=jnp.bfloat16 is the production setting (2-4x MXU throughput, half-size
    PCA weight); keep float32 when ~1e-3 accuracy is required.
    """
    N, D, H, W = x_nchw.shape
    K = w_assign.shape[0]
    OUT = w_pca.shape[0]
    S = H * W
    mdt = matmul_dtype

    # --- batch tiling: >=2 grid steps for small N (v7x megacore); raise bn for production ---
    if bn is None:
        bn = max(1, (N + 1) // 2) if N <= 8 else 8
    Np = _round_up(N, bn)
    G = Np // bn

    # --- OUT tiling: stream the PCA weight in lane-dense (K*D, OUT_t) blocks ---
    out_tile = _round_up(out_tile, 128)
    OUT_t = min(_round_up(OUT, 128), out_tile)
    OUTp = _round_up(OUT, OUT_t)
    J = OUTp // OUT_t
    normalize_in_kernel = (J == 1)   # final L2 norm needs every OUT column at once

    # --- host-side layout prep (tiny next to the kernel work) ---
    x_sd = jnp.transpose(x_nchw.reshape(N, D, S), (0, 2, 1))         # (N, S, D)
    if Np != N:
        x_sd = jnp.pad(x_sd, ((0, Np - N), (0, 0), (0, 0)))
    w_dk = jnp.asarray(w_assign).T                                   # (D, K)
    cent = jnp.asarray(centroids)                                    # (K, D)
    # PCA weight: (OUT, K*D) -> (K*D, OUTp); column order k*D + d matches torch's flatten.
    wp = jnp.pad(w_pca, ((0, OUTp - OUT), (0, 0))).T.astype(mdt)     # (K*D, OUTp)
    b_row = jnp.pad(b_pca, (0, OUTp - OUT)).reshape(1, OUTp)

    kernel = _make_kernel(bn, S, D, K, mdt, normalize_in_kernel)

    grid_spec = pltpu.PrefetchScalarGridSpec(
        num_scalar_prefetch=0,
        grid=(G, J),
        in_specs=[
            pl.BlockSpec((bn, S, D), lambda i, j: (i, 0, 0)),
            # TODO(synk): grid-invariant weight blocks could be single-buffered
            # (pipeline_mode=pl.Buffered(1)) to reclaim VMEM on v7x; left at the default.
            pl.BlockSpec((D, K), lambda i, j: (0, 0)),
            pl.BlockSpec((K, D), lambda i, j: (0, 0)),
            pl.BlockSpec((K * D, OUT_t), lambda i, j: (0, j)),
            pl.BlockSpec((1, OUT_t), lambda i, j: (0, j)),
        ],
        out_specs=pl.BlockSpec((1, bn, OUT_t), lambda i, j: (i, 0, j)),
        scratch_shapes=[
            pltpu.VMEM((bn, K, D), jnp.float32),
            pltpu.VMEM((bn, K * D), jnp.float32),
        ],
    )

    # Raise the scoped-VMEM limit only when the tiles actually need it.
    def _nbytes(shape, dt):
        return math.prod(shape) * jnp.dtype(dt).itemsize
    est = (2 * _nbytes((bn, S, D), jnp.float32)
           + 2 * _nbytes((K * D, OUT_t), mdt)
           + 2 * (_nbytes((D, K), jnp.float32) + _nbytes((K, D), jnp.float32)
                  + _nbytes((1, OUT_t), jnp.float32))
           + 2 * _nbytes((1, bn, OUT_t), jnp.float32)
           + _nbytes((bn, K, D), jnp.float32) + _nbytes((bn, K * D), jnp.float32))
    vmem_limit = None
    if est > 30 * 1024 * 1024:
        # Cap ~100 MiB for v5e/v6e; drop to ~48-56 MiB when targeting v7x's 64 MiB VMEM.
        vmem_limit = min(int(est * 1.25), 100 * 1024 * 1024)

    out3 = pl.pallas_call(
        kernel,
        out_shape=jax.ShapeDtypeStruct((G, bn, OUTp), jnp.float32),
        grid_spec=grid_spec,
        compiler_params=pltpu.CompilerParams(
            dimension_semantics=("parallel", "arbitrary"),
            vmem_limit_bytes=vmem_limit),
    )(x_sd, w_dk, cent, wp, b_row)

    out = out3.reshape(Np, OUTp)[:N, :OUT]
    if not normalize_in_kernel:
        # OUT was tiled: apply the (tiny) final L2 norm here over the full OUT dim.
        yn = jnp.sum(out * out, axis=-1, keepdims=True)
        out = out * lax.rsqrt(jnp.maximum(yn, EPS2))
    return out


def _reference(x_nchw, w_assign, centroids, w_pca, b_pca):
    # Pure-JAX mirror of the PyTorch NetVLAD (+ PCA) forward, for validation.
    N, D, H, W = x_nchw.shape
    x = jnp.transpose(x_nchw, (0, 2, 3, 1)).reshape(N, H * W, D)
    xn = x / jnp.maximum(jnp.linalg.norm(x, axis=-1, keepdims=True), EPS)
    logits = jnp.einsum("nsd,kd->nsk", xn, w_assign)
    a = jax.nn.softmax(logits, axis=-1)
    agg = jnp.einsum("nsk,nsd->nkd", a, xn)
    vlad = agg - jnp.sum(a, axis=1)[..., None] * centroids[None]
    vlad = vlad / jnp.maximum(jnp.linalg.norm(vlad, axis=-1, keepdims=True), EPS)
    flat = vlad.reshape(N, -1)
    flat = flat / jnp.maximum(jnp.linalg.norm(flat, axis=-1, keepdims=True), EPS)
    y = flat @ w_pca.T + b_pca[None]
    y = y / jnp.maximum(jnp.linalg.norm(y, axis=-1, keepdims=True), EPS)
    return y


if __name__ == "__main__":
    # Small shapes consistent with the module:
    # batch N=2, descriptor dim D=16, clusters K=8, spatial 8x8, PCA out dim=32.
    N, D, H, W = 2, 16, 8, 8
    K = 8
    OUT = 32

    key = jax.random.PRNGKey(0)
    k_x, k_wa, k_c, k_wp, k_bp = jax.random.split(key, 5)

    x = jax.random.normal(k_x, (N, D, H, W), dtype=jnp.float32)
    # NetVLAD params: 1x1 conv weight (K, D) (no bias), centroids (K, D)
    w_assign = jax.random.normal(k_wa, (K, D), dtype=jnp.float32) * 0.1
    centroids = jax.random.uniform(k_c, (K, D), dtype=jnp.float32)
    # PCA layer: Conv2d(K*D, OUT, 1) -> weight (OUT, K*D), bias (OUT,)
    w_pca = jax.random.normal(k_wp, (OUT, K * D), dtype=jnp.float32) * 0.05
    b_pca = jax.random.normal(k_bp, (OUT,), dtype=jnp.float32) * 0.01

    ref = _reference(x, w_assign, centroids, w_pca, b_pca)

    # f32 matmul operands (default): tight check.
    run = jax.jit(netvlad_pca)
    out = jax.block_until_ready(run(x, w_assign, centroids, w_pca, b_pca))
    assert out.shape == (N, OUT)
    err = float(jnp.max(jnp.abs(out - ref)))
    assert jnp.allclose(out, ref, atol=5e-3, rtol=5e-3), err

    # bf16 matmul operands (production throughput path): looser check.
    run_bf16 = jax.jit(functools.partial(netvlad_pca, matmul_dtype=jnp.bfloat16))
    out_bf16 = jax.block_until_ready(run_bf16(x, w_assign, centroids, w_pca, b_pca))
    err_bf16 = float(jnp.max(jnp.abs(out_bf16 - ref)))
    assert jnp.allclose(out_bf16, ref, atol=5e-2, rtol=5e-2), err_bf16

    print("KERNEL_OK")
</pallas_src>

<mosaic_0001>
module attributes {stable_mosaic.version = 11 : i64} {
  func.func @kernel(%arg0: i32, %arg1: i32, %arg2: memref<1x64x16xf32, #tpu.memory_space<vmem>>, %arg3: memref<16x8xf32, #tpu.memory_space<vmem>>, %arg4: memref<8x16xf32, #tpu.memory_space<vmem>>, %arg5: memref<128x128xf32, #tpu.memory_space<vmem>>, %arg6: memref<1x128xf32, #tpu.memory_space<vmem>>, %arg7: memref<1x1x128xf32, #tpu.memory_space<vmem>>, %arg8: memref<1x8x16xf32, #tpu.memory_space<vmem>>, %arg9: memref<1x128xf32, #tpu.memory_space<vmem>>) attributes {dimension_semantics = [#tpu.dimension_semantics<parallel>, #tpu.dimension_semantics<arbitrary>], iteration_bounds = array<i64: 2, 1>, scalar_prefetch = 0 : i64, scratch_operands = 2 : i64, tpu.core_type = #tpu.core_type<tc>, window_params = [{transform_indices = @transform_0, window_bounds = array<i64: 1, 64, 16>}, {pipeline_mode = #tpu.pipeline_mode<synchronous>, transform_indices = @transform_1, window_bounds = array<i64: 16, 8>}, {pipeline_mode = #tpu.pipeline_mode<synchronous>, transform_indices = @transform_2, window_bounds = array<i64: 8, 16>}, {transform_indices = @transform_3, window_bounds = array<i64: 128, 128>}, {transform_indices = @transform_4, window_bounds = array<i64: 1, 128>}, {transform_indices = @transform_5, window_bounds = array<i64: 1, 1, 128>}]} {
    %c0_i32 = arith.constant 0 : i32
    %0 = arith.cmpi eq, %arg1, %c0_i32 : i32
    %1 = arith.extui %0 : i1 to i32
    %c0_i32_0 = arith.constant 0 : i32
    %2 = arith.cmpi ne, %1, %c0_i32_0 : i32
    scf.if %2 {
      %c0_11 = arith.constant 0 : index
      %c0_12 = arith.constant 0 : index
      %19 = vector.load %arg3[%c0_11, %c0_12] : memref<16x8xf32, #tpu.memory_space<vmem>>, vector<16x8xf32>
      %c0_13 = arith.constant 0 : index
      %c0_14 = arith.constant 0 : index
      %20 = vector.load %arg4[%c0_13, %c0_14] : memref<8x16xf32, #tpu.memory_space<vmem>>, vector<8x16xf32>
      %cst_15 = arith.constant 1.000000e+00 : f32
      %21 = vector.broadcast %cst_15 : f32 to vector<64x1xf32>
      %c0_i32_16 = arith.constant 0 : i32
      %22 = arith.index_cast %c0_i32_16 : i32 to index
      %c0_17 = arith.constant 0 : index
      %c0_18 = arith.constant 0 : index
      %23 = vector.load %arg2[%22, %c0_17, %c0_18] : memref<1x64x16xf32, #tpu.memory_space<vmem>>, vector<1x64x16xf32>
      %24 = vector.shape_cast %23 : vector<1x64x16xf32> to vector<64x16xf32>
      %25 = arith.mulf %24, %24 : vector<64x16xf32>
      %cst_19 = arith.constant dense<0.000000e+00> : vector<64xf32>
      %26 = vector.multi_reduction <add>, %25, %cst_19 [1] : vector<64x16xf32> to vector<64xf32>
      %27 = vector.shape_cast %26 : vector<64xf32> to vector<64x1xf32>
      %cst_20 = arith.constant 1.000000e-24 : f32
      %28 = vector.broadcast %cst_20 : f32 to vector<64x1xf32>
      %29 = arith.maximumf %27, %28 : vector<64x1xf32>
      %30 = math.rsqrt %29 : vector<64x1xf32>
      %31 = vector.broadcast %30 : vector<64x1xf32> to vector<64x16xf32>
      %32 = arith.mulf %24, %31 : vector<64x16xf32>
      %cst_21 = arith.constant dense<0.000000e+00> : vector<64x8xf32>
      %33 = tpu.matmul %32, %19, %cst_21 {dimension_numbers = #tpu.dot_dimension_numbers<[1], [0], [0], [1], [0, 0, 1, 1], [], []>} : vector<64x16xf32>, vector<16x8xf32>, vector<64x8xf32> -> vector<64x8xf32>
      %cst_22 = arith.constant dense<0xFF800000> : vector<64xf32>
      %34 = vector.multi_reduction <maximumf>, %33, %cst_22 [1] : vector<64x8xf32> to vector<64xf32>
      %35 = vector.shape_cast %34 : vector<64xf32> to vector<64x1xf32>
      %36 = vector.broadcast %35 : vector<64x1xf32> to vector<64x8xf32>
      %37 = arith.subf %33, %36 : vector<64x8xf32>
      %38 = math.exp %37 : vector<64x8xf32>
      %cst_23 = arith.constant dense<0.000000e+00> : vector<64xf32>
      %39 = vector.multi_reduction <add>, %38, %cst_23 [1] : vector<64x8xf32> to vector<64xf32>
      %40 = vector.shape_cast %39 : vector<64xf32> to vector<64x1xf32>
      %41 = tpu.reciprocal %40 {approx = true} : vector<64x1xf32> -> vector<64x1xf32>
      %42 = vector.broadcast %41 : vector<64x1xf32> to vector<64x8xf32>
      %43 = arith.mulf %38, %42 : vector<64x8xf32>
      %cst_24 = arith.constant dense<0.000000e+00> : vector<8x16xf32>
      %44 = tpu.matmul %43, %32, %cst_24 {dimension_numbers = #tpu.dot_dimension_numbers<[0], [0], [1], [1], [0, 1, 1, 1], [], []>} : vector<64x8xf32>, vector<64x16xf32>, vector<8x16xf32> -> vector<8x16xf32>
      %cst_25 = arith.constant dense<0.000000e+00> : vector<8x1xf32>
      %45 = tpu.matmul %43, %21, %cst_25 {dimension_numbers = #tpu.dot_dimension_numbers<[0], [0], [1], [1], [0, 1, 1, 1], [], []>} : vector<64x8xf32>, vector<64x1xf32>, vector<8x1xf32> -> vector<8x1xf32>
      %46 = vector.broadcast %45 : vector<8x1xf32> to vector<8x16xf32>
      %47 = arith.mulf %20, %46 : vector<8x16xf32>
      %48 = arith.subf %44, %47 : vector<8x16xf32>
      %49 = arith.mulf %48, %48 : vector<8x16xf32>
      %cst_26 = arith.constant dense<0.000000e+00> : vector<8xf32>
      %50 = vector.multi_reduction <add>, %49, %cst_26 [1] : vector<8x16xf32> to vector<8xf32>
      %51 = vector.shape_cast %50 : vector<8xf32> to vector<8x1xf32>
      %cst_27 = arith.constant 1.000000e-24 : f32
      %52 = vector.broadcast %cst_27 : f32 to vector<8x1xf32>
      %53 = arith.maximumf %51, %52 : vector<8x1xf32>
      %54 = math.rsqrt %53 : vector<8x1xf32>
      %55 = vector.broadcast %54 : vector<8x1xf32> to vector<8x16xf32>
      %56 = arith.mulf %48, %55 : vector<8x16xf32>
      %57 = arith.mulf %51, %54 : vector<8x1xf32>
      %58 = arith.mulf %57, %54 : vector<8x1xf32>
      %cst_28 = arith.constant dense<0.000000e+00> : vector<1xf32>
      %59 = vector.multi_reduction <add>, %58, %cst_28 [0] : vector<8x1xf32> to vector<1xf32>
      %60 = vector.shape_cast %59 : vector<1xf32> to vector<1x1xf32>
      %cst_29 = arith.constant 1.000000e-24 : f32
      %61 = vector.broadcast %cst_29 : f32 to vector<1x1xf32>
      %62 = arith.maximumf %60, %61 : vector<1x1xf32>
      %63 = math.rsqrt %62 : vector<1x1xf32>
      %64 = vector.broadcast %63 : vector<1x1xf32> to vector<8x16xf32>
      %65 = arith.mulf %56, %64 : vector<8x16xf32>
      %66 = arith.index_cast %c0_i32_16 : i32 to index
      %c0_30 = arith.constant 0 : index
      %c0_31 = arith.constant 0 : index
      %67 = vector.load %arg8[%66, %c0_30, %c0_31] : memref<1x8x16xf32, #tpu.memory_space<vmem>>, vector<1x8x16xf32>
      %68 = vector.shape_cast %67 : vector<1x8x16xf32> to vector<8x16xf32>
      %69 = vector.shape_cast %65 : vector<8x16xf32> to vector<1x8x16xf32>
      tpu.vector_store %arg8[%66, %c0_30, %c0_31], %69 {strides = array<i32>} : memref<1x8x16xf32, #tpu.memory_space<vmem>>, vector<1x8x16xf32>,
      %c1_i32 = arith.constant 1 : i32
      %c0_32 = arith.constant 0 : index
      %c0_33 = arith.constant 0 : index
      %c0_34 = arith.constant 0 : index
      %70 = vector.load %arg8[%c0_32, %c0_33, %c0_34] : memref<1x8x16xf32, #tpu.memory_space<vmem>>, vector<1x8x16xf32>
      %71 = vector.shape_cast %70 : vector<1x8x16xf32> to vector<1x128xf32>
      %c0_35 = arith.constant 0 : index
      %c0_36 = arith.constant 0 : index
      %72 = vector.load %arg9[%c0_35, %c0_36] : memref<1x128xf32, #tpu.memory_space<vmem>>, vector<1x128xf32>
      tpu.vector_store %arg9[%c0_35, %c0_36], %71 {strides = array<i32>} : memref<1x128xf32, #tpu.memory_space<vmem>>, vector<1x128xf32>,
    } else {
    }
    %c0 = arith.constant 0 : index
    %c0_1 = arith.constant 0 : index
    %3 = vector.load %arg9[%c0, %c0_1] : memref<1x128xf32, #tpu.memory_space<vmem>>, vector<1x128xf32>
    %c0_2 = arith.constant 0 : index
    %c0_3 = arith.constant 0 : index
    %4 = vector.load %arg5[%c0_2, %c0_3] : memref<128x128xf32, #tpu.memory_space<vmem>>, vector<128x128xf32>
    %cst = arith.constant dense<0.000000e+00> : vector<1x128xf32>
    %5 = tpu.matmul %3, %4, %cst {dimension_numbers = #tpu.dot_dimension_numbers<[1], [0], [0], [1], [0, 0, 1, 1], [], []>} : vector<1x128xf32>, vector<128x128xf32>, vector<1x128xf32> -> vector<1x128xf32>
    %c0_4 = arith.constant 0 : index
    %c0_5 = arith.constant 0 : index
    %6 = vector.load %arg6[%c0_4, %c0_5] : memref<1x128xf32, #tpu.memory_space<vmem>>, vector<1x128xf32>
    %7 = arith.addf %5, %6 : vector<1x128xf32>
    %8 = arith.mulf %7, %7 : vector<1x128xf32>
    %cst_6 = arith.constant dense<0.000000e+00> : vector<1xf32>
    %9 = vector.multi_reduction <add>, %8, %cst_6 [1] : vector<1x128xf32> to vector<1xf32>
    %10 = vector.shape_cast %9 : vector<1xf32> to vector<1x1xf32>
    %cst_7 = arith.constant 1.000000e-24 : f32
    %11 = vector.broadcast %cst_7 : f32 to vector<1x1xf32>
    %12 = arith.maximumf %10, %11 : vector<1x1xf32>
    %13 = math.rsqrt %12 : vector<1x1xf32>
    %14 = vector.broadcast %13 : vector<1x1xf32> to vector<1x128xf32>
    %15 = arith.mulf %7, %14 : vector<1x128xf32>
    %c0_8 = arith.constant 0 : index
    %c0_9 = arith.constant 0 : index
    %c0_10 = arith.constant 0 : index
    %16 = vector.load %arg7[%c0_8, %c0_9, %c0_10] : memref<1x1x128xf32, #tpu.memory_space<vmem>>, vector<1x1x128xf32>
    %17 = vector.shape_cast %16 : vector<1x1x128xf32> to vector<1x128xf32>
    %18 = vector.shape_cast %15 : vector<1x128xf32> to vector<1x1x128xf32>
    tpu.vector_store %arg7[%c0_8, %c0_9, %c0_10], %18 {strides = array<i32>} : memref<1x1x128xf32, #tpu.memory_space<vmem>>, vector<1x1x128xf32>,
    return
  }
  func.func @transform_0(%arg0: i32, %arg1: i32) -> (i32, i32, i32) {
    %c0_i32 = arith.constant 0 : i32
    %c0_i32_0 = arith.constant 0 : i32
    %c0_i32_1 = arith.constant 0 : i32
    return %arg0, %c0_i32, %c0_i32_0 : i32, i32, i32
  }
  func.func @transform_1(%arg0: i32, %arg1: i32) -> (i32, i32) {
    %c0_i32 = arith.constant 0 : i32
    %c0_i32_0 = arith.constant 0 : i32
    %c0_i32_1 = arith.constant 0 : i32
    return %c0_i32, %c0_i32_0 : i32, i32
  }
  func.func @transform_2(%arg0: i32, %arg1: i32) -> (i32, i32) {
    %c0_i32 = arith.constant 0 : i32
    %c0_i32_0 = arith.constant 0 : i32
    %c0_i32_1 = arith.constant 0 : i32
    return %c0_i32, %c0_i32_0 : i32, i32
  }
  func.func @transform_3(%arg0: i32, %arg1: i32) -> (i32, i32) {
    %c0_i32 = arith.constant 0 : i32
    %c0_i32_0 = arith.constant 0 : i32
    return %c0_i32, %arg1 : i32, i32
  }
  func.func @transform_4(%arg0: i32, %arg1: i32) -> (i32, i32) {
    %c0_i32 = arith.constant 0 : i32
    %c0_i32_0 = arith.constant 0 : i32
    return %c0_i32, %arg1 : i32, i32
  }
  func.func @transform_5(%arg0: i32, %arg1: i32) -> (i32, i32, i32) {
    %c0_i32 = arith.constant 0 : i32
    %c0_i32_0 = arith.constant 0 : i32
    return %arg0, %c0_i32, %arg1 : i32, i32, i32
  }
}

</mosaic_0001>

<llo_original>
// kernel: netvlad_pca.1
$region0: #{netvlad_pca.1}
  #allocation0 [shape = 'u32[]', space=smem, size = 0x4, offset = 0x4, fixed_abs, tag = 'smem constant byte address 0x4 - core index']
  #allocation1 [shape = 'u32[144,128]{1,0:T(1,128)}', space=vmem, size = 0x12000, scoped, tag = 'internal scratch']
  #allocation2 [shape = 'f32[1,8,16]{2,1,0:T(8,128)}', space=vmem, size = 0x1000, scoped, tag = 'scratch operand']
  #allocation3 [shape = 'f32[1,128]{1,0:T(1,128)}', space=vmem, size = 0x200, scoped, tag = 'scratch operand']
  %s0 = inlined_call_operand.vmem [shape: f32[2,64,16], index: 0, kind: input, shape index: {}]
  %s1 = inlined_call_operand.vmem [shape: f32[16,8], index: 1, kind: input, shape index: {}]
  %s2 = inlined_call_operand.vmem [shape: f32[8,16], index: 2, kind: input, shape index: {}]
  %s3 = inlined_call_operand.vmem [shape: f32[128,128], index: 3, kind: input, shape index: {}]
  %s4 = inlined_call_operand.vmem [shape: f32[1,128], index: 4, kind: input, shape index: {}]
  %s5 = inlined_call_operand.hbm [shape: f32[2,1,128], index: 5, kind: output, shape index: {}]
  %s6 = sld [smem:[#allocation0]]
  $region57: #{netvlad_pca.1} parent=0
    _
  %s8 = ssub.s32 1, %s6
  %s9 = scalar_select 0, %s8, %s6
  $region1: #{netvlad_pca.1} parent=0
    #allocation4 [shape = 'u8[1024]{0}', space=vmem, size = 0x400, scoped, tag = 'output window, operand 0']
    #allocation5 [shape = 's32[2]{0}', space=sflag, size = 0x8, scoped, tag = 'scoped memory for netvlad_pca.1']
    %10 = vsyncpa [#allocation5], 0
    %s11 = scalar_lea.sflag [#allocation5], 1
    %12 = vsyncpa %s11, 0
    loop: start=0, step=1, limit=4
    $region2: #{netvlad_pca.1} parent=1 // loop_pre_header
      _
    $region3: #{netvlad_pca.1} parent=1 // loop_header
      %s14 = sphi 0, %s18
      %p15 = scmp.ge.s32.totalorder %s14, 4
      %s21 = sphi 0, %s33
      %s22 = sphi 0, %s29
      %s23 = sphi 0, %s21
      %s24 = sphi 0, %s22
      %s25 = sphi 0, %s23
      %s26 = sphi 0, %s24
      %s36 = sphi 0, %s38
      %s39 = sphi 0, %s36
      %s40 = sphi 0, %s39
      %s56 = sphi 0, %s40
      %s60 = sphi 0, %s60
      %s62 = sphi 0, %s60
      %s63 = sphi 0, %s62
      %s77 = sphi 0, %s63
      %s81 = sphi 0, %s81
      %s83 = sphi 0, %s81
      %s84 = sphi 0, %s83
      %s98 = sphi 0, %s84
      %s104 = sphi 0, %s106
      %s107 = sphi 0, %s104
      %s108 = sphi 0, %s107
      %s124 = sphi 0, %s108
      %s130 = sphi 0, %s132
      %s133 = sphi 0, %s130
      %s134 = sphi 0, %s133
      %s150 = sphi 0, %s134
      %s158 = sphi 0, %s160
      %s161 = sphi 0, %s158
      %s162 = sphi 0, %s161
      %s178 = sphi 0, %s162
    $region4: #{netvlad_pca.1} parent=1 // loop_header_branch
      %17 = sbr.rel (%p15) target = $region8
    $region5: #{netvlad_pca.1} parent=1 // loop_body
      %s19 = ssub.s32 %s14, 1
      %s20 = ssub.s32 %s14, 2
      %s27 = sadd.s32 1, %s22
      %p28 = scmp.ge.s32.totalorder %s27, 1
      %s29 = scalar_select %p28, 0, %s27
      %s30 = sadd.s32 1, %s21
      %s31 = scalar_select %p28, %s30, %s21
      %p32 = scmp.ge.s32.totalorder %s31, 2
      %s33 = scalar_select %p32, 0, %s31
      %s34 = ssub.s32 %s21, %s33
      %p35 = scmp.eq.s32.totalorder %s34, 0
      %s37 = sadd.s32 %s36, 1
      %s38 = scalar_select %p35, %s36, %s37
      %p41 = pneg %p35
      %p42 = scmp.eq.s32.totalorder %s14, 1
      %p43 = por %p41, %p42
      %p44 = scmp.ne.s32.totalorder %s36, %s39
      %p45 = scmp.eq.s32.totalorder %s14, 0
      %p46 = por %p44, %p45
      %p47 = scmp.ne.s32.totalorder %s36, %s39
      %p48 = scmp.eq.s32.totalorder %s19, 1
      %p49 = por %p47, %p48
      %p50 = scmp.ne.s32.totalorder %s39, %s40
      %p51 = scmp.eq.s32.totalorder %s19, 0
      %p52 = por %p50, %p51
      %p53 = scmp.ne.s32.totalorder %s39, %s40
      %p54 = scmp.eq.s32.totalorder %s20, 1
      %p55 = por %p53, %p54
      %p57 = scmp.ne.s32.totalorder %s40, %s56
      %p58 = scmp.eq.s32.totalorder %s20, 0
      %p59 = por %p57, %p58
      %s61 = sadd.s32 %s60, 1
      %p64 = scmp.eq.s32.totalorder %s14, 1
      %p65 = scmp.ne.s32.totalorder %s60, %s62
      %p66 = scmp.eq.s32.totalorder %s14, 0
      %p67 = por %p65, %p66
      %p68 = scmp.ne.s32.totalorder %s60, %s62
      %p69 = scmp.eq.s32.totalorder %s19, 1
      %p70 = por %p68, %p69
      %p71 = scmp.ne.s32.totalorder %s62, %s63
      %p72 = scmp.eq.s32.totalorder %s19, 0
      %p73 = por %p71, %p72
      %p74 = scmp.ne.s32.totalorder %s62, %s63
      %p75 = scmp.eq.s32.totalorder %s20, 1
      %p76 = por %p74, %p75
      %p78 = scmp.ne.s32.totalorder %s63, %s77
      %p79 = scmp.eq.s32.totalorder %s20, 0
      %p80 = por %p78, %p79
      %s82 = sadd.s32 %s81, 1
      %p85 = scmp.eq.s32.totalorder %s14, 1
      %p86 = scmp.ne.s32.totalorder %s81, %s83
      %p87 = scmp.eq.s32.totalorder %s14, 0
      %p88 = por %p86, %p87
      %p89 = scmp.ne.s32.totalorder %s81, %s83
      %p90 = scmp.eq.s32.totalorder %s19, 1
      %p91 = por %p89, %p90
      %p92 = scmp.ne.s32.totalorder %s83, %s84
      %p93 = scmp.eq.s32.totalorder %s19, 0
      %p94 = por %p92, %p93
      %p95 = scmp.ne.s32.totalorder %s83, %s84
      %p96 = scmp.eq.s32.totalorder %s20, 1
      %p97 = por %p95, %p96
      %p99 = scmp.ne.s32.totalorder %s84, %s98
      %p100 = scmp.eq.s32.totalorder %s20, 0
      %p101 = por %p99, %p100
      %s102 = ssub.s32 %s22, %s29
      %p103 = scmp.eq.s32.totalorder %s102, 0
      %s105 = sadd.s32 %s104, 1
      %s106 = scalar_select %p103, %s104, %s105
      %p109 = pneg %p103
      %p110 = scmp.eq.s32.totalorder %s14, 1
      %p111 = por %p109, %p110
      %p112 = scmp.ne.s32.totalorder %s104, %s107
      %p113 = scmp.eq.s32.totalorder %s14, 0
      %p114 = por %p112, %p113
      %p115 = scmp.ne.s32.totalorder %s104, %s107
      %p116 = scmp.eq.s32.totalorder %s19, 1
      %p117 = por %p115, %p116
      %p118 = scmp.ne.s32.totalorder %s107, %s108
      %p119 = scmp.eq.s32.totalorder %s19, 0
      %p120 = por %p118, %p119
      %p121 = scmp.ne.s32.totalorder %s107, %s108
      %p122 = scmp.eq.s32.totalorder %s20, 1
      %p123 = por %p121, %p122
      %p125 = scmp.ne.s32.totalorder %s108, %s124
      %p126 = scmp.eq.s32.totalorder %s20, 0
      %p127 = por %p125, %p126
      %s128 = ssub.s32 %s22, %s29
      %p129 = scmp.eq.s32.totalorder %s128, 0
      %s131 = sadd.s32 %s130, 1
      %s132 = scalar_select %p129, %s130, %s131
      %p135 = pneg %p129
      %p136 = scmp.eq.s32.totalorder %s14, 1
      %p137 = por %p135, %p136
      %p138 = scmp.ne.s32.totalorder %s130, %s133
      %p139 = scmp.eq.s32.totalorder %s14, 0
      %p140 = por %p138, %p139
      %p141 = scmp.ne.s32.totalorder %s130, %s133
      %p142 = scmp.eq.s32.totalorder %s19, 1
      %p143 = por %p141, %p142
      %p144 = scmp.ne.s32.totalorder %s133, %s134
      %p145 = scmp.eq.s32.totalorder %s19, 0
      %p146 = por %p144, %p145
      %p147 = scmp.ne.s32.totalorder %s133, %s134
      %p148 = scmp.eq.s32.totalorder %s20, 1
      %p149 = por %p147, %p148
      %p151 = scmp.ne.s32.totalorder %s134, %s150
      %p152 = scmp.eq.s32.totalorder %s20, 0
      %p153 = por %p151, %p152
      %s154 = ssub.s32 %s21, %s33
      %s155 = ssub.s32 %s22, %s29
      %s156 = sor.u32 %s154, %s155
      %p157 = scmp.eq.s32.totalorder %s156, 0
      %s159 = sadd.s32 %s158, 1
      %s160 = scalar_select %p157, %s158, %s159
      %p163 = pneg %p157
      %p164 = scmp.eq.s32.totalorder %s14, 1
      %p165 = por %p163, %p164
      %p166 = scmp.ne.s32.totalorder %s158, %s161
      %p167 = scmp.eq.s32.totalorder %s14, 0
      %p168 = por %p166, %p167
      %p169 = scmp.ne.s32.totalorder %s158, %s161
      %p170 = scmp.eq.s32.totalorder %s19, 1
      %p171 = por %p169, %p170
      %p172 = scmp.ne.s32.totalorder %s161, %s162
      %p173 = scmp.eq.s32.totalorder %s19, 0
      %p174 = por %p172, %p173
      %p175 = scmp.ne.s32.totalorder %s161, %s162
      %p176 = scmp.eq.s32.totalorder %s20, 1
      %p177 = por %p175, %p176
      %p179 = scmp.ne.s32.totalorder %s162, %s178
      %p180 = scmp.eq.s32.totalorder %s20, 0
      %p181 = por %p179, %p180
      %p182 = scmp.le.s32.totalorder 1, %s14
      %p183 = scmp.lt.s32.totalorder %s14, 3
      %p184 = pnand %p182, %p183
      %p185 = pneg %p184
      // Predicated region
      $region9: #{netvlad_pca.1} parent=5 // pred_check
        _
      $region10: #{netvlad_pca.1} parent=5 // pred_check_branch
        %187 = sbr.rel (%p184) target = $region12
      $region11: #{netvlad_pca.1} parent=5 // pred_region
        %s188 = ssub.s32 %s14, 1
        // Predicated region
        $region13: #{netvlad_pca.1} parent=11 // pred_check
          %p189 = pneg %p73
        $region14: #{netvlad_pca.1} parent=11 // pred_check_branch
          %191 = sbr.rel (%p189) target = $region16
        $region15: #{netvlad_pca.1} parent=11 // pred_region
          _
        $region16: #{netvlad_pca.1} parent=11 // pred_fallthru
          _
        // Predicated region
        $region17: #{netvlad_pca.1} parent=11 // pred_check
          %p192 = pneg %p94
        $region18: #{netvlad_pca.1} parent=11 // pred_check_branch
          %194 = sbr.rel (%p192) target = $region20
        $region19: #{netvlad_pca.1} parent=11 // pred_region
          _
        $region20: #{netvlad_pca.1} parent=11 // pred_fallthru
          _
        // Predicated region
        $region21: #{netvlad_pca.1} parent=11 // pred_check
          %p195 = pneg %p120
        $region22: #{netvlad_pca.1} parent=11 // pred_check_branch
          %197 = sbr.rel (%p195) target = $region24
        $region23: #{netvlad_pca.1} parent=11 // pred_region
          %p198 = scmp.lt.s32.totalorder %s24, 0
          %s199 = scalar_select %p198, %s24, 0
          %s200 = smul.addr %s199, 8
          %s201 = scalar_lea.vmem %s3, %s200
        $region24: #{netvlad_pca.1} parent=11 // pred_fallthru
          _
        // Predicated region
        $region25: #{netvlad_pca.1} parent=11 // pred_check
          %p202 = pneg %p146
        $region26: #{netvlad_pca.1} parent=11 // pred_check_branch
          %204 = sbr.rel (%p202) target = $region28
        $region27: #{netvlad_pca.1} parent=11 // pred_region
          %p205 = scmp.lt.s32.totalorder %s24, 0
          %s206 = scalar_select %p205, %s24, 0
          %s207 = scalar_lea.vmem %s4, %s206
        $region28: #{netvlad_pca.1} parent=11 // pred_fallthru
          _
      $region12: #{netvlad_pca.1} parent=5 // pred_fallthru
        _
      %p208 = scmp.lt.s32.totalorder %s14, 2
      // Predicated region
      $region29: #{netvlad_pca.1} parent=5 // pred_check
        %p209 = pneg %p208
      $region30: #{netvlad_pca.1} parent=5 // pred_check_branch
        %211 = sbr.rel (%p209) target = $region32
      $region31: #{netvlad_pca.1} parent=5 // pred_region
        // Predicated region
        $region33: #{netvlad_pca.1} parent=31 // pred_check
          %p212 = pneg %p46
        $region34: #{netvlad_pca.1} parent=31 // pred_check_branch
          %214 = sbr.rel (%p212) target = $region36
        $region35: #{netvlad_pca.1} parent=31 // pred_region
          %p215 = scmp.lt.s32.totalorder %s21, 1
          %s216 = scalar_select %p215, %s21, 1
          %s217 = smul.addr %s216, 8
          %s218 = smul.addr %s217, 8
          %s219 = scalar_lea.vmem %s0, %s218
        $region36: #{netvlad_pca.1} parent=31 // pred_fallthru
          _
      $region32: #{netvlad_pca.1} parent=5 // pred_fallthru
        _
      %p220 = scmp.le.s32.totalorder 1, %s14
      %p221 = scmp.lt.s32.totalorder %s14, 3
      %p222 = pnand %p220, %p221
      %p223 = pneg %p222
      // Predicated region
      $region37: #{netvlad_pca.1} parent=5 // pred_check
        _
      $region38: #{netvlad_pca.1} parent=5 // pred_check_branch
        %225 = sbr.rel (%p222) target = $region40
      $region39: #{netvlad_pca.1} parent=5 // pred_region
        %s226 = ssub.s32 %s14, 1
        %p227 = scmp.lt.s32.totalorder %s23, 1
        %s228 = scalar_select %p227, %s23, 1
        %s229 = smul.addr %s228, 8
        %s230 = smul.addr %s229, 8
        %s231 = scalar_lea.vmem %s0, %s230
        %p232 = pneg %p52
        %p233 = pneg %p49
        %p234 = pneg %p73
        %p235 = pneg %p70
        %p236 = pneg %p94
        %p237 = pneg %p91
        %p238 = scmp.lt.s32.totalorder %s24, 0
        %s239 = scalar_select %p238, %s24, 0
        %s240 = smul.addr %s239, 8
        %s241 = scalar_lea.vmem %s3, %s240
        %p242 = pneg %p120
        %p243 = pneg %p117
        %p244 = scmp.lt.s32.totalorder %s24, 0
        %s245 = scalar_select %p244, %s24, 0
        %s246 = scalar_lea.vmem %s4, %s245
        %p247 = pneg %p146
        %p248 = pneg %p143
        %p249 = pneg %p174
        %p250 = pneg %p171
        %s251 = sand.u32 %s161, 1
        %s252 = scalar_lea.sflag [#allocation5], %s251
        %s253 = sand.u32 %s161, 1
        %s254 = scalar_lea.vmem [#allocation4], %s253
        %p255 = scmp.lt.s32.totalorder %s23, 1
        %s256 = scalar_select %p255, %s23, 1
        %s257 = smul.addr %s256, 8
        %s258 = smul.addr %s257, 8
        %s259 = scalar_lea.vmem %s0, %s258
        %p260 = scmp.lt.s32.totalorder %s24, 0
        %s261 = scalar_select %p260, %s24, 0
        %s262 = smul.addr %s261, 8
        %s263 = scalar_lea.vmem %s3, %s262
        %p264 = scmp.lt.s32.totalorder %s24, 0
        %s265 = scalar_select %p264, %s24, 0
        %s266 = scalar_lea.vmem %s4, %s265
        %p267 = scmp.eq.s32.totalorder %s24, 0
        // Predicated region
        $region41: #{netvlad_pca.1} parent=39 // pred_check
          %p268 = pneg %p267
        $region42: #{netvlad_pca.1} parent=39 // pred_check_branch
          %270 = sbr.rel (%p268) target = $region44
        $region43: #{netvlad_pca.1} parent=39 // pred_region
          %v271 = vld [vmem:[%s1] sm:$0xff]
          %v272 = vld [vmem:[%s1 + $0x8] sm:$0xff]
          %v273 = vld [vmem:[%s2] sm:$0xff]
          %v274 = vld [vmem:[%s259] sm:$0xff]
          %v275 = vld [vmem:[%s259 + $0x8] sm:$0xff]
          %v276 = vld [vmem:[%s259 + $0x10] sm:$0xff]
          %v277 = vld [vmem:[%s259 + $0x18] sm:$0xff]
          %v278 = vld [vmem:[%s259 + $0x20] sm:$0xff]
          %v279 = vld [vmem:[%s259 + $0x28] sm:$0xff]
          %v280 = vld [vmem:[%s259 + $0x30] sm:$0xff]
          %v281 = vld [vmem:[%s259 + $0x38] sm:$0xff]
          %v282 = vmul.f32 %v274, %v274
          %v283 = vmul.f32 %v275, %v275
          %v284 = vmul.f32 %v276, %v276
          %v285 = vmul.f32 %v277, %v277
          %v286 = vmul.f32 %v278, %v278
          %v287 = vmul.f32 %v279, %v279
          %v288 = vmul.f32 %v280, %v280
          %v289 = vmul.f32 %v281, %v281
          %vm290 = vcmask 130048
          %v291 = vsel %vm290, %v282, 0.0
          %292 = vadd.xlane.f32.xlu0 %v291
          %v293 = vpop.xlane.xlu0 %292
          %v294 = vsel %vm290, %v283, 0.0
          %295 = vadd.xlane.f32.xlu0 %v294
          %v296 = vpop.xlane.xlu0 %295
          %v297 = vsel %vm290, %v284, 0.0
          %298 = vadd.xlane.f32.xlu0 %v297
          %v299 = vpop.xlane.xlu0 %298
          %v300 = vsel %vm290, %v285, 0.0
          %301 = vadd.xlane.f32.xlu0 %v300
          %v302 = vpop.xlane.xlu0 %301
          %v303 = vsel %vm290, %v286, 0.0
          %304 = vadd.xlane.f32.xlu0 %v303
          %v305 = vpop.xlane.xlu0 %304
          %v306 = vsel %vm290, %v287, 0.0
          %307 = vadd.xlane.f32.xlu0 %v306
          %v308 = vpop.xlane.xlu0 %307
          %v309 = vsel %vm290, %v288, 0.0
          %310 = vadd.xlane.f32.xlu0 %v309
          %v311 = vpop.xlane.xlu0 %310
          %v312 = vsel %vm290, %v289, 0.0
          %313 = vadd.xlane.f32.xlu0 %v312
          %v314 = vpop.xlane.xlu0 %313
          %v315 = vmax.f32 %v293, 1e-24
          %v316 = vmax.f32 %v296, 1e-24
          %v317 = vmax.f32 %v299, 1e-24
          %v318 = vmax.f32 %v302, 1e-24
          %v319 = vmax.f32 %v305, 1e-24
          %v320 = vmax.f32 %v308, 1e-24
          %v321 = vmax.f32 %v311, 1e-24
          %v322 = vmax.f32 %v314, 1e-24
          %v323 = vrsqrt.pop %v315
          %v324 = vrsqrt.pop %v316
          %v325 = vrsqrt.pop %v317
          %v326 = vrsqrt.pop %v318
          %v327 = vrsqrt.pop %v319
          %v328 = vrsqrt.pop %v320
          %v329 = vrsqrt.pop %v321
          %v330 = vrsqrt.pop %v322
          %v331 = vmul.f32 %v274, %v323
          %v332 = vmul.f32 %v275, %v324
          %v333 = vmul.f32 %v276, %v325
          %v334 = vmul.f32 %v277, %v326
          %v335 = vmul.f32 %v278, %v327
          %v336 = vmul.f32 %v279, %v328
          %v337 = vmul.f32 %v280, %v329
          %v338 = vmul.f32 %v281, %v330
          %v340 = vsel %vm290, %v331, 0
          %v343 = vsel %vm290, %v332, 0
          %v346 = vsel %vm290, %v333, 0
          %v349 = vsel %vm290, %v334, 0
          %v352 = vsel %vm290, %v335, 0
          %v355 = vsel %vm290, %v336, 0
          %v358 = vsel %vm290, %v337, 0
          %v361 = vsel %vm290, %v338, 0
          %363 = vmatprep.subr.mxu0 0.0
          %364 = vmatpush1.msra.mxu0 0.0
          %365 = vmatprep.subr.mxu0 0.0
          %366 = vmatpush1.msra.mxu0 0.0
          %367 = vmatprep.subr.mxu0 0.0
          %368 = vmatpush1.msra.mxu0 0.0
          %369 = vmatprep.subr.mxu0 0.0
          %370 = vmatpush1.msra.mxu0 0.0
          %371 = vmatprep.subr.mxu0 0.0
          %372 = vmatpush1.msra.mxu0 0.0
          %373 = vmatprep.subr.mxu0 0.0
          %374 = vmatpush1.msra.mxu0 0.0
          %375 = vmatprep.subr.mxu0 0.0
          %376 = vmatpush1.msra.mxu0 0.0
          %377 = vmatprep.subr.mxu0 0.0
          %378 = vmatpush1.msra.mxu0 0.0
          %379 = vmatprep.subr.mxu0 0.0
          %380 = vmatpush1.msra.mxu0 0.0
          %381 = vmatprep.subr.mxu0 0.0
          %382 = vmatpush1.msra.mxu0 0.0
          %383 = vmatprep.subr.mxu0 0.0
          %384 = vmatpush1.msra.mxu0 0.0
          %385 = vmatprep.subr.mxu0 0.0
          %386 = vmatpush1.msra.mxu0 0.0
          %387 = vmatprep.subr.mxu0 0.0
          %388 = vmatpush1.msra.mxu0 0.0
          %389 = vmatprep.subr.mxu0 0.0
          %390 = vmatpush1.msra.mxu0 0.0
          %391 = vmatprep.subr.mxu0 0.0
          %392 = vmatpush1.msra.mxu0 %v272
          %393 = vmatprep.subr.mxu0 0.0
          %394 = vmatpush1.msra.mxu0 %v271
          %395 = vmatprep.subr.mxu0 0.0
          %396 = vmatpush2.msra.mxu0 0.0
          %397 = vmatprep.subr.mxu0 0.0
          %398 = vmatpush2.msra.mxu0 0.0
          %399 = vmatprep.subr.mxu0 0.0
          %400 = vmatpush2.msra.mxu0 0.0
          %401 = vmatprep.subr.mxu0 0.0
          %402 = vmatpush2.msra.mxu0 0.0
          %403 = vmatprep.subr.mxu0 0.0
          %404 = vmatpush2.msra.mxu0 0.0
          %405 = vmatprep.subr.mxu0 0.0
          %406 = vmatpush2.msra.mxu0 0.0
          %407 = vmatprep.subr.mxu0 0.0
          %408 = vmatpush2.msra.mxu0 0.0
          %409 = vmatprep.subr.mxu0 0.0
          %410 = vmatpush2.msra.mxu0 0.0
          %411 = vmatprep.subr.mxu0 0.0
          %412 = vmatpush2.msra.mxu0 0.0
          %413 = vmatprep.subr.mxu0 0.0
          %414 = vmatpush2.msra.mxu0 0.0
          %415 = vmatprep.subr.mxu0 0.0
          %416 = vmatpush2.msra.mxu0 0.0
          %417 = vmatprep.subr.mxu0 0.0
          %418 = vmatpush2.msra.mxu0 0.0
          %419 = vmatprep.subr.mxu0 0.0
          %420 = vmatpush2.msra.mxu0 0.0
          %421 = vmatprep.subr.mxu0 0.0
          %422 = vmatpush2.msra.mxu0 0.0
          %423 = vmatprep.subr.mxu0 0.0
          %424 = vmatpush2.msra.mxu0 0.0
          %425 = vmatprep.subr.mxu0 0.0
          %426 = vmatpush2.msra.mxu0 0.0
          %427 = vmatprep.mubr.f32.mxu0 0.0
          %428 = vmatmul.mubr.f32.gmra.mxu0 %v340
          %v429 = vpop.f32.mrf.mxu0
          %v430 = vadd.f32 0.0, %v429
          %v431 = vpop.f32.mrf.mxu0
          %432 = vmatprep.mubr.f32.mxu0 0.0
          %433 = vmatmul.mubr.f32.gmra.mxu0 %v343
          %v434 = vpop.f32.mrf.mxu0
          %v435 = vadd.f32 0.0, %v434
          %v436 = vpop.f32.mrf.mxu0
          %437 = vmatprep.mubr.f32.mxu0 0.0
          %438 = vmatmul.mubr.f32.gmra.mxu0 %v346
          %v439 = vpop.f32.mrf.mxu0
          %v440 = vadd.f32 0.0, %v439
          %v441 = vpop.f32.mrf.mxu0
          %442 = vmatprep.mubr.f32.mxu0 0.0
          %443 = vmatmul.mubr.f32.gmra.mxu0 %v349
          %v444 = vpop.f32.mrf.mxu0
          %v445 = vadd.f32 0.0, %v444
          %v446 = vpop.f32.mrf.mxu0
          %447 = vmatprep.mubr.f32.mxu0 0.0
          %448 = vmatmul.mubr.f32.gmra.mxu0 %v352
          %v449 = vpop.f32.mrf.mxu0
          %v450 = vadd.f32 0.0, %v449
          %v451 = vpop.f32.mrf.mxu0
          %452 = vmatprep.mubr.f32.mxu0 0.0
          %453 = vmatmul.mubr.f32.gmra.mxu0 %v355
          %v454 = vpop.f32.mrf.mxu0
          %v455 = vadd.f32 0.0, %v454
          %v456 = vpop.f32.mrf.mxu0
          %457 = vmatprep.mubr.f32.mxu0 0.0
          %458 = vmatmul.mubr.f32.gmra.mxu0 %v358
          %v459 = vpop.f32.mrf.mxu0
          %v460 = vadd.f32 0.0, %v459
          %v461 = vpop.f32.mrf.mxu0
          %462 = vmatprep.mubr.f32.mxu0 0.0
          %463 = vmatmul.mubr.f32.gmra.mxu0 %v361
          %v464 = vpop.f32.mrf.mxu0
          %v465 = vadd.f32 0.0, %v464
          %v466 = vpop.f32.mrf.mxu0
          %467 = vdwg.mxu0
          %vm468 = vcmask 64512
          %v469 = vsel %vm468, %v430, -inf
          %470 = vmax.xlane.f32.xlu0 %v469
          %v471 = vpop.xlane.xlu0 %470
          %v472 = vsel %vm468, %v435, -inf
          %473 = vmax.xlane.f32.xlu0 %v472
          %v474 = vpop.xlane.xlu0 %473
          %v475 = vsel %vm468, %v440, -inf
          %476 = vmax.xlane.f32.xlu0 %v475
          %v477 = vpop.xlane.xlu0 %476
          %v478 = vsel %vm468, %v445, -inf
          %479 = vmax.xlane.f32.xlu0 %v478
          %v480 = vpop.xlane.xlu0 %479
          %v481 = vsel %vm468, %v450, -inf
          %482 = vmax.xlane.f32.xlu0 %v481
          %v483 = vpop.xlane.xlu0 %482
          %v484 = vsel %vm468, %v455, -inf
          %485 = vmax.xlane.f32.xlu0 %v484
          %v486 = vpop.xlane.xlu0 %485
          %v487 = vsel %vm468, %v460, -inf
          %488 = vmax.xlane.f32.xlu0 %v487
          %v489 = vpop.xlane.xlu0 %488
          %v490 = vsel %vm468, %v465, -inf
          %491 = vmax.xlane.f32.xlu0 %v490
          %v492 = vpop.xlane.xlu0 %491
          %v493 = vsub.f32 %v430, %v471
          %v494 = vsub.f32 %v435, %v474
          %v495 = vsub.f32 %v440, %v477
          %v496 = vsub.f32 %v445, %v480
          %v497 = vsub.f32 %v450, %v483
          %v498 = vsub.f32 %v455, %v486
          %v499 = vsub.f32 %v460, %v489
          %v500 = vsub.f32 %v465, %v492
          %v501 = vmul.f32 %v493, 1.442695
          %v502 = vpow.pop %v501
          %v503 = vmul.f32 %v494, 1.442695
          %v504 = vpow.pop %v503
          %v505 = vmul.f32 %v495, 1.442695
          %v506 = vpow.pop %v505
          %v507 = vmul.f32 %v496, 1.442695
          %v508 = vpow.pop %v507
          %v509 = vmul.f32 %v497, 1.442695
          %v510 = vpow.pop %v509
          %v511 = vmul.f32 %v498, 1.442695
          %v512 = vpow.pop %v511
          %v513 = vmul.f32 %v499, 1.442695
          %v514 = vpow.pop %v513
          %v515 = vmul.f32 %v500, 1.442695
          %v516 = vpow.pop %v515
          %v517 = vsel %vm468, %v502, 0.0
          %518 = vadd.xlane.f32.xlu0 %v517
          %v519 = vpop.xlane.xlu0 %518
          %v520 = vsel %vm468, %v504, 0.0
          %521 = vadd.xlane.f32.xlu0 %v520
          %v522 = vpop.xlane.xlu0 %521
          %v523 = vsel %vm468, %v506, 0.0
          %524 = vadd.xlane.f32.xlu0 %v523
          %v525 = vpop.xlane.xlu0 %524
          %v526 = vsel %vm468, %v508, 0.0
          %527 = vadd.xlane.f32.xlu0 %v526
          %v528 = vpop.xlane.xlu0 %527
          %v529 = vsel %vm468, %v510, 0.0
          %530 = vadd.xlane.f32.xlu0 %v529
          %v531 = vpop.xlane.xlu0 %530
          %v532 = vsel %vm468, %v512, 0.0
          %533 = vadd.xlane.f32.xlu0 %v532
          %v534 = vpop.xlane.xlu0 %533
          %v535 = vsel %vm468, %v514, 0.0
          %536 = vadd.xlane.f32.xlu0 %v535
          %v537 = vpop.xlane.xlu0 %536
          %v538 = vsel %vm468, %v516, 0.0
          %539 = vadd.xlane.f32.xlu0 %v538
          %v540 = vpop.xlane.xlu0 %539
          %v541 = vrcp.pop %v519
          %v542 = vrcp.pop %v522
          %v543 = vrcp.pop %v525
          %v544 = vrcp.pop %v528
          %v545 = vrcp.pop %v531
          %v546 = vrcp.pop %v534
          %v547 = vrcp.pop %v537
          %v548 = vrcp.pop %v540
          %v549 = vmul.f32 %v502, %v541
          %v550 = vmul.f32 %v504, %v542
          %v551 = vmul.f32 %v506, %v543
          %v552 = vmul.f32 %v508, %v544
          %v553 = vmul.f32 %v510, %v545
          %v554 = vmul.f32 %v512, %v546
          %v555 = vmul.f32 %v514, %v547
          %v556 = vmul.f32 %v516, %v548
          %557 = vxpose.xlu0.b32.start [1/16] %v549, 128
          %558 = vxpose.xlu0.b32.cont [2/16] %v550, 128
          %559 = vxpose.xlu0.b32.cont [3/16] %v551, 128
          %560 = vxpose.xlu0.b32.cont [4/16] %v552, 128
          %561 = vxpose.xlu0.b32.cont [5/16] %v553, 128
          %562 = vxpose.xlu0.b32.cont [6/16] %v554, 128
          %563 = vxpose.xlu0.b32.cont [7/16] %v555, 128
          %564 = vxpose.xlu0.b32.cont [8/16] %v556, 128
          %565 = vxpose.xlu0.b32.cont [9/16] 0.0, 128
          %566 = vxpose.xlu0.b32.cont [10/16] 0.0, 128
          %567 = vxpose.xlu0.b32.cont [11/16] 0.0, 128
          %568 = vxpose.xlu0.b32.cont [12/16] 0.0, 128
          %569 = vxpose.xlu0.b32.cont [13/16] 0.0, 128
          %570 = vxpose.xlu0.b32.cont [14/16] 0.0, 128
          %571 = vxpose.xlu0.b32.cont [15/16] 0.0, 128
          %572 = vxpose.xlu0.b32.end [16/16] 0.0, 128
          %v573 = vpop.trf.xlu0
          %v574 = vpop.trf.xlu0
          %v575 = vpop.trf.xlu0
          %v576 = vpop.trf.xlu0
          %v577 = vpop.trf.xlu0
          %v578 = vpop.trf.xlu0
          %v579 = vpop.trf.xlu0
          %v580 = vpop.trf.xlu0
          %v581 = vpop.trf.xlu0
          %v582 = vpop.trf.xlu0
          %v583 = vpop.trf.xlu0
          %v584 = vpop.trf.xlu0
          %v585 = vpop.trf.xlu0
          %v586 = vpop.trf.xlu0
          %v587 = vpop.trf.xlu0
          %v588 = vpop.trf.xlu0
          %vm589 = vcmask 523264
          %v591 = vsel %vm589, %v573, 0
          %593 = vmatprep.subr.mxu0 0.0
          %594 = vmatpush1.msra.mxu0 0.0
          %595 = vmatprep.subr.mxu0 0.0
          %596 = vmatpush1.msra.mxu0 0.0
          %597 = vmatprep.subr.mxu0 0.0
          %598 = vmatpush1.msra.mxu0 0.0
          %599 = vmatprep.subr.mxu0 0.0
          %600 = vmatpush1.msra.mxu0 0.0
          %601 = vmatprep.subr.mxu0 0.0
          %602 = vmatpush1.msra.mxu0 0.0
          %603 = vmatprep.subr.mxu0 0.0
          %604 = vmatpush1.msra.mxu0 0.0
          %605 = vmatprep.subr.mxu0 0.0
          %606 = vmatpush1.msra.mxu0 0.0
          %607 = vmatprep.subr.mxu0 0.0
          %608 = vmatpush1.msra.mxu0 0.0
          %609 = vmatprep.subr.mxu0 0.0
          %610 = vmatpush1.msra.mxu0 %v338
          %611 = vmatprep.subr.mxu0 0.0
          %612 = vmatpush1.msra.mxu0 %v337
          %613 = vmatprep.subr.mxu0 0.0
          %614 = vmatpush1.msra.mxu0 %v336
          %615 = vmatprep.subr.mxu0 0.0
          %616 = vmatpush1.msra.mxu0 %v335
          %617 = vmatprep.subr.mxu0 0.0
          %618 = vmatpush1.msra.mxu0 %v334
          %619 = vmatprep.subr.mxu0 0.0
          %620 = vmatpush1.msra.mxu0 %v333
          %621 = vmatprep.subr.mxu0 0.0
          %622 = vmatpush1.msra.mxu0 %v332
          %623 = vmatprep.subr.mxu0 0.0
          %624 = vmatpush1.msra.mxu0 %v331
          %625 = vmatprep.subr.mxu0 0.0
          %626 = vmatpush2.msra.mxu0 0.0
          %627 = vmatprep.subr.mxu0 0.0
          %628 = vmatpush2.msra.mxu0 0.0
          %629 = vmatprep.subr.mxu0 0.0
          %630 = vmatpush2.msra.mxu0 0.0
          %631 = vmatprep.subr.mxu0 0.0
          %632 = vmatpush2.msra.mxu0 0.0
          %633 = vmatprep.subr.mxu0 0.0
          %634 = vmatpush2.msra.mxu0 0.0
          %635 = vmatprep.subr.mxu0 0.0
          %636 = vmatpush2.msra.mxu0 0.0
          %637 = vmatprep.subr.mxu0 0.0
          %638 = vmatpush2.msra.mxu0 0.0
          %639 = vmatprep.subr.mxu0 0.0
          %640 = vmatpush2.msra.mxu0 0.0
          %641 = vmatprep.subr.mxu0 0.0
          %642 = vmatpush2.msra.mxu0 0.0
          %643 = vmatprep.subr.mxu0 0.0
          %644 = vmatpush2.msra.mxu0 0.0
          %645 = vmatprep.subr.mxu0 0.0
          %646 = vmatpush2.msra.mxu0 0.0
          %647 = vmatprep.subr.mxu0 0.0
          %648 = vmatpush2.msra.mxu0 0.0
          %649 = vmatprep.subr.mxu0 0.0
          %650 = vmatpush2.msra.mxu0 0.0
          %651 = vmatprep.subr.mxu0 0.0
          %652 = vmatpush2.msra.mxu0 0.0
          %653 = vmatprep.subr.mxu0 0.0
          %654 = vmatpush2.msra.mxu0 0.0
          %655 = vmatprep.subr.mxu0 0.0
          %656 = vmatpush2.msra.mxu0 0.0
          %657 = vmatprep.mubr.f32.mxu0 0.0
          %658 = vmatmul.mubr.f32.gmra.mxu0 %v591
          %v659 = vpop.f32.mrf.mxu0
          %v660 = vadd.f32 0.0, %v659
          %v661 = vpop.f32.mrf.mxu0
          %662 = vdwg.mxu0
          %663 = vmatprep.subr.mxu0 0.0
          %664 = vmatpush1.msra.mxu0 0.0
          %665 = vmatprep.subr.mxu0 0.0
          %666 = vmatpush1.msra.mxu0 0.0
          %667 = vmatprep.subr.mxu0 0.0
          %668 = vmatpush1.msra.mxu0 0.0
          %669 = vmatprep.subr.mxu0 0.0
          %670 = vmatpush1.msra.mxu0 0.0
          %671 = vmatprep.subr.mxu0 0.0
          %672 = vmatpush1.msra.mxu0 0.0
          %673 = vmatprep.subr.mxu0 0.0
          %674 = vmatpush1.msra.mxu0 0.0
          %675 = vmatprep.subr.mxu0 0.0
          %676 = vmatpush1.msra.mxu0 0.0
          %677 = vmatprep.subr.mxu0 0.0
          %678 = vmatpush1.msra.mxu0 0.0
          %679 = vmatprep.subr.mxu0 0.0
          %680 = vmatpush1.msra.mxu0 1.0
          %681 = vmatprep.subr.mxu0 0.0
          %682 = vmatpush1.msra.mxu0 1.0
          %683 = vmatprep.subr.mxu0 0.0
          %684 = vmatpush1.msra.mxu0 1.0
          %685 = vmatprep.subr.mxu0 0.0
          %686 = vmatpush1.msra.mxu0 1.0
          %687 = vmatprep.subr.mxu0 0.0
          %688 = vmatpush1.msra.mxu0 1.0
          %689 = vmatprep.subr.mxu0 0.0
          %690 = vmatpush1.msra.mxu0 1.0
          %691 = vmatprep.subr.mxu0 0.0
          %692 = vmatpush1.msra.mxu0 1.0
          %693 = vmatprep.subr.mxu0 0.0
          %694 = vmatpush1.msra.mxu0 1.0
          %695 = vmatprep.subr.mxu0 0.0
          %696 = vmatpush2.msra.mxu0 0.0
          %697 = vmatprep.subr.mxu0 0.0
          %698 = vmatpush2.msra.mxu0 0.0
          %699 = vmatprep.subr.mxu0 0.0
          %700 = vmatpush2.msra.mxu0 0.0
          %701 = vmatprep.subr.mxu0 0.0
          %702 = vmatpush2.msra.mxu0 0.0
          %703 = vmatprep.subr.mxu0 0.0
          %704 = vmatpush2.msra.mxu0 0.0
          %705 = vmatprep.subr.mxu0 0.0
          %706 = vmatpush2.msra.mxu0 0.0
          %707 = vmatprep.subr.mxu0 0.0
          %708 = vmatpush2.msra.mxu0 0.0
          %709 = vmatprep.subr.mxu0 0.0
          %710 = vmatpush2.msra.mxu0 0.0
          %711 = vmatprep.subr.mxu0 0.0
          %712 = vmatpush2.msra.mxu0 0.0
          %713 = vmatprep.subr.mxu0 0.0
          %714 = vmatpush2.msra.mxu0 0.0
          %715 = vmatprep.subr.mxu0 0.0
          %716 = vmatpush2.msra.mxu0 0.0
          %717 = vmatprep.subr.mxu0 0.0
          %718 = vmatpush2.msra.mxu0 0.0
          %719 = vmatprep.subr.mxu0 0.0
          %720 = vmatpush2.msra.mxu0 0.0
          %721 = vmatprep.subr.mxu0 0.0
          %722 = vmatpush2.msra.mxu0 0.0
          %723 = vmatprep.subr.mxu0 0.0
          %724 = vmatpush2.msra.mxu0 0.0
          %725 = vmatprep.subr.mxu0 0.0
          %726 = vmatpush2.msra.mxu0 0.0
          %727 = vmatprep.mubr.f32.mxu0 0.0
          %728 = vmatmul.mubr.f32.gmra.mxu0 %v591
          %v729 = vpop.f32.mrf.mxu0
          %v730 = vadd.f32 0.0, %v729
          %v731 = vpop.f32.mrf.mxu0
          %732 = vdwg.mxu0
          %734 = vset.pattern.permute.xlu0 0
          %735 = vperm.xlu0 %734, %v730
          %v736 = vpop.permute.xlu0 %735
          %v738 = vmul.f32 %v273, %v736
          %v739 = vsub.f32 %v660, %v738
          %v740 = vmul.f32 %v739, %v739
          %v741 = vsel %vm290, %v740, 0.0
          %742 = vadd.xlane.f32.xlu0 %v741
          %v743 = vpop.xlane.xlu0 %742
          %v744 = vmax.f32 %v743, 1e-24
          %v745 = vrsqrt.pop %v744
          %v746 = vmul.f32 %v739, %v745
          %v747 = vmul.f32 %v743, %v745
          %v748 = vmul.f32 %v747, %v745
          %v749 = vrot.slane %v748, 4
          %v750 = vadd.f32 %v748, %v749
          %v751 = vrot.slane %v750, 2
          %v752 = vadd.f32 %v750, %v751
          %v753 = vrot.slane %v752, 1
          %v754 = vadd.f32 %v752, %v753
          %v755 = vmax.f32 %v754, 1e-24
          %v756 = vrsqrt.pop %v755
          %v757 = vmul.f32 %v746, %v756
          %758 = vst.msk [vmem:[#allocation2] sm:$0xff] %vm290, %v757
          %v759 = vld [vmem:[#allocation2] sm:$0xff]
          %v760 = vcombine.high %v759, 0.0
          %v762 = vunpack.c.l.s4 1983009808
          %v763 = vunpack.c.0.s8 %v762
          %v764 = vlaneseq
          %v765 = vshrl.u32 %v764, 7
          %v766 = vsub.s32 %v763, %v765
          %v767 = vrot.slane %v759, %v766
          %v769 = vunpack.c.l.s4 1983009808
          %v770 = vunpack.c.0.s8 %v769
          %v771 = vlaneseq
          %v772 = vshrl.u32 %v771, 7
          %v773 = vsub.s32 %v770, %v772
          %v774 = vrot.slane %v760, %v773
          %v775 = vcombine.high %v767, 0.0
          %v777 = vunpack.c.l.s4 1934713408
          %v778 = vunpack.c.0.s8 %v777
          %v779 = vlaneseq
          %v780 = vshrl.u32 %v779, 7
          %v781 = vsub.s32 %v778, %v780
          %v782 = vrot.slane %v767, %v781
          %v784 = vunpack.c.l.s4 1934713408
          %v785 = vunpack.c.0.s8 %v784
          %v786 = vlaneseq
          %v787 = vshrl.u32 %v786, 7
          %v788 = vsub.s32 %v785, %v787
          %v789 = vrot.slane %v775, %v788
          %v790 = vcombine.high %v774, 0.0
          %v792 = vunpack.c.l.s4 1934713408
          %v793 = vunpack.c.0.s8 %v792
          %v794 = vlaneseq
          %v795 = vshrl.u32 %v794, 7
          %v796 = vsub.s32 %v793, %v795
          %v797 = vrot.slane %v774, %v796
          %v799 = vunpack.c.l.s4 1934713408
          %v800 = vunpack.c.0.s8 %v799
          %v801 = vlaneseq
          %v802 = vshrl.u32 %v801, 7
          %v803 = vsub.s32 %v800, %v802
          %v804 = vrot.slane %v790, %v803
          %v805 = vcombine.high %v782, 0.0
          %v806 = vcombine.high %v789, 0.0
          %v807 = vcombine.high %v797, 0.0
          %v808 = vcombine.high %v804, 0.0
          %810 = vrot.lane.b32.xlu0 %v805, 16
          %v811 = vpop.permute.xlu0 %810
          %814 = vrot.lane.b32.xlu0 %v789, 32
          %v815 = vpop.permute.xlu0 %814
          %818 = vrot.lane.b32.xlu0 %v806, 48
          %v819 = vpop.permute.xlu0 %818
          %822 = vrot.lane.b32.xlu0 %v797, 64
          %v823 = vpop.permute.xlu0 %822
          %826 = vrot.lane.b32.xlu0 %v807, 80
          %v827 = vpop.permute.xlu0 %826
          %830 = vrot.lane.b32.xlu0 %v804, 96
          %v831 = vpop.permute.xlu0 %830
          %834 = vrot.lane.b32.xlu0 %v808, 112
          %v835 = vpop.permute.xlu0 %834
          %v837 = vsel %vm290, %v782, %v811
          %vm838 = vcmask 261120
          %v839 = vsel %vm838, %v837, %v815
          %vm840 = vcmask 392192
          %v841 = vsel %vm840, %v839, %v819
          %v842 = vsel %vm589, %v841, %v823
          %vm843 = vcmask 654336
          %v844 = vsel %vm843, %v842, %v827
          %vm845 = vcmask 785408
          %v846 = vsel %vm845, %v844, %v831
          %vm847 = vcmask 916480
          %v848 = vsel %vm847, %v846, %v835
          %849 = vst [vmem:[#allocation3] sm:$0x1] %v848
        $region44: #{netvlad_pca.1} parent=39 // pred_fallthru
          _
        %v850 = vld [vmem:[#allocation3] sm:$0x1]
        %v851 = vld [vmem:[%s263] sm:$0xff]
        %v852 = vld [vmem:[%s263 + $0x8] sm:$0xff]
        %v853 = vld [vmem:[%s263 + $0x10] sm:$0xff]
        %v854 = vld [vmem:[%s263 + $0x18] sm:$0xff]
        %v855 = vld [vmem:[%s263 + $0x20] sm:$0xff]
        %v856 = vld [vmem:[%s263 + $0x28] sm:$0xff]
        %v857 = vld [vmem:[%s263 + $0x30] sm:$0xff]
        %v858 = vld [vmem:[%s263 + $0x38] sm:$0xff]
        %v859 = vld [vmem:[%s263 + $0x40] sm:$0xff]
        %v860 = vld [vmem:[%s263 + $0x48] sm:$0xff]
        %v861 = vld [vmem:[%s263 + $0x50] sm:$0xff]
        %v862 = vld [vmem:[%s263 + $0x58] sm:$0xff]
        %v863 = vld [vmem:[%s263 + $0x60] sm:$0xff]
        %v864 = vld [vmem:[%s263 + $0x68] sm:$0xff]
        %v865 = vld [vmem:[%s263 + $0x70] sm:$0xff]
        %v866 = vld [vmem:[%s263 + $0x78] sm:$0xff]
        %v867 = vld [vmem:[%s266] sm:$0x1]
        %868 = vmatprep.subr.mxu0 0.0
        %869 = vmatpush1.msra.mxu0 %v866
        %870 = vmatprep.subr.mxu0 0.0
        %871 = vmatpush1.msra.mxu0 %v865
        %872 = vmatprep.subr.mxu0 0.0
        %873 = vmatpush1.msra.mxu0 %v864
        %874 = vmatprep.subr.mxu0 0.0
        %875 = vmatpush1.msra.mxu0 %v863
        %876 = vmatprep.subr.mxu0 0.0
        %877 = vmatpush1.msra.mxu0 %v862
        %878 = vmatprep.subr.mxu0 0.0
        %879 = vmatpush1.msra.mxu0 %v861
        %880 = vmatprep.subr.mxu0 0.0
        %881 = vmatpush1.msra.mxu0 %v860
        %882 = vmatprep.subr.mxu0 0.0
        %883 = vmatpush1.msra.mxu0 %v859
        %884 = vmatprep.subr.mxu0 0.0
        %885 = vmatpush1.msra.mxu0 %v858
        %886 = vmatprep.subr.mxu0 0.0
        %887 = vmatpush1.msra.mxu0 %v857
        %888 = vmatprep.subr.mxu0 0.0
        %889 = vmatpush1.msra.mxu0 %v856
        %890 = vmatprep.subr.mxu0 0.0
        %891 = vmatpush1.msra.mxu0 %v855
        %892 = vmatprep.subr.mxu0 0.0
        %893 = vmatpush1.msra.mxu0 %v854
        %894 = vmatprep.subr.mxu0 0.0
        %895 = vmatpush1.msra.mxu0 %v853
        %896 = vmatprep.subr.mxu0 0.0
        %897 = vmatpush1.msra.mxu0 %v852
        %898 = vmatprep.subr.mxu0 0.0
        %899 = vmatpush1.msra.mxu0 %v851
        %900 = vmatprep.subr.mxu0 0.0
        %901 = vmatpush2.msra.mxu0 0.0
        %902 = vmatprep.subr.mxu0 0.0
        %903 = vmatpush2.msra.mxu0 0.0
        %904 = vmatprep.subr.mxu0 0.0
        %905 = vmatpush2.msra.mxu0 0.0
        %906 = vmatprep.subr.mxu0 0.0
        %907 = vmatpush2.msra.mxu0 0.0
        %908 = vmatprep.subr.mxu0 0.0
        %909 = vmatpush2.msra.mxu0 0.0
        %910 = vmatprep.subr.mxu0 0.0
        %911 = vmatpush2.msra.mxu0 0.0
        %912 = vmatprep.subr.mxu0 0.0
        %913 = vmatpush2.msra.mxu0 0.0
        %914 = vmatprep.subr.mxu0 0.0
        %915 = vmatpush2.msra.mxu0 0.0
        %916 = vmatprep.subr.mxu0 0.0
        %917 = vmatpush2.msra.mxu0 0.0
        %918 = vmatprep.subr.mxu0 0.0
        %919 = vmatpush2.msra.mxu0 0.0
        %920 = vmatprep.subr.mxu0 0.0
        %921 = vmatpush2.msra.mxu0 0.0
        %922 = vmatprep.subr.mxu0 0.0
        %923 = vmatpush2.msra.mxu0 0.0
        %924 = vmatprep.subr.mxu0 0.0
        %925 = vmatpush2.msra.mxu0 0.0
        %926 = vmatprep.subr.mxu0 0.0
        %927 = vmatpush2.msra.mxu0 0.0
        %928 = vmatprep.subr.mxu0 0.0
        %929 = vmatpush2.msra.mxu0 0.0
        %930 = vmatprep.subr.mxu0 0.0
        %931 = vmatpush2.msra.mxu0 0.0
        %932 = vmatprep.mubr.f32.mxu0 0.0
        %933 = vmatmul.mubr.f32.gmra.mxu0 %v850
        %v934 = vpop.f32.mrf.mxu0
        %v935 = vadd.f32 %v867, %v934
        %v936 = vpop.f32.mrf.mxu0
        %937 = vdwg.mxu0
        %v938 = vmul.f32 %v935, %v935
        %vm939 = vcmask 1040384
        %v940 = vsel %vm939, %v938, 0.0
        %941 = vadd.xlane.f32.xlu0 %v940
        %v942 = vpop.xlane.xlu0 %941
        %v943 = vmax.f32 %v942, 1e-24
        %v944 = vrsqrt.pop %v943
        %v945 = vmul.f32 %v935, %v944
        %946 = vst [vmem:[%s254] sm:$0x1] %v945
        %s947 = sand.u32 %s161, 1
        %s948 = scalar_lea.sflag [#allocation5], %s947
        %s949 = sand.u32 %s161, 1
        %s950 = scalar_lea.vmem [#allocation4], %s949
        // Predicated region
        $region45: #{netvlad_pca.1} parent=39 // pred_check
          %p951 = pneg %p171
        $region46: #{netvlad_pca.1} parent=39 // pred_check_branch
          %953 = sbr.rel (%p951) target = $region48
        $region47: #{netvlad_pca.1} parent=39 // pred_region
          %s955 = ssub.s32 16, 16
          %956 = vsyncadd %s948, %s955
          %s957 = sadd.s32 %s24, %s23
          %s958 = smul.addr %s957, 16
          %s959 = scalar_lea.hbm %s5, %s958
          %s961 = sshll.u32 %s950, 4
          %s962 = int_to_ptr.vmem [resolvable:$true] %s961
          %964 = dma.vmem_to_hbm [thread:$0]  %s962, 16, %s959, %s948
        $region48: #{netvlad_pca.1} parent=39 // pred_fallthru
          _
      $region40: #{netvlad_pca.1} parent=5 // pred_fallthru
        _
      %p965 = scmp.le.s32.totalorder 2, %s14
      // Predicated region
      $region49: #{netvlad_pca.1} parent=5 // pred_check
        %p966 = pneg %p965
      $region50: #{netvlad_pca.1} parent=5 // pred_check_branch
        %968 = sbr.rel (%p966) target = $region52
      $region51: #{netvlad_pca.1} parent=5 // pred_region
        %s969 = ssub.s32 %s14, 2
        // Predicated region
        $region53: #{netvlad_pca.1} parent=51 // pred_check
          %p970 = pneg %p177
        $region54: #{netvlad_pca.1} parent=51 // pred_check_branch
          %972 = sbr.rel (%p970) target = $region56
        $region55: #{netvlad_pca.1} parent=51 // pred_region
          %s973 = sand.u32 %s162, 1
          %s974 = scalar_lea.sflag [#allocation5], %s973
          %s975 = sand.u32 %s162, 1
          %s976 = scalar_lea.vmem [#allocation4], %s975
          %977 = dma.done %s974, 16
        $region56: #{netvlad_pca.1} parent=51 // pred_fallthru
          _
      $region52: #{netvlad_pca.1} parent=5 // pred_fallthru
        _
    $region6: #{netvlad_pca.1} parent=1 // loop_footer
      %s18 = sadd.s32 1, %s14
    $region7: #{netvlad_pca.1} parent=1 // loop_footer_branch
      %13 = sbr.rel target = $region3
    $region8: #{netvlad_pca.1} parent=1 // loop_exit
      _
    %978 = vsyncpa [#allocation5], 1
    %s979 = scalar_lea.sflag [#allocation5], 1
    %980 = vsyncpa %s979, 1

</llo_original>
